<compile_context>
chip_gen: v6e
topology: v6e:2x2x1
jax: 0.10.0
libtpu: 0.0.40
codegen_flags: <defaults>
</compile_context>

<pallas_src>
import functools

import jax
import jax.numpy as jnp
from jax import lax
from jax.experimental import pallas as pl
from jax.experimental.pallas import tpu as pltpu


def _msm_loss_kernel(sqcol_ref, sqrow_ref, ycol_ref, yrow_ref, x_ref, xc_ref,
                     out_ref, rowmax_ref, rowmin_ref, *, margin):
    j = pl.program_id(0)
    n = x_ref.shape[0]

    NEG = jnp.float32(-jnp.inf)
    POS = jnp.float32(jnp.inf)

    @pl.when(j == 0)
    def _init():
        rowmax_ref[...] = jnp.full_like(rowmax_ref, NEG)
        rowmin_ref[...] = jnp.full_like(rowmin_ref, POS)

    x = x_ref[...]    # (n, d)  f32, resident across all grid steps
    xc = xc_ref[...]  # (tc, d) f32, the rows of X that form this column tile

    # Gram block on the MXU: x @ xc.T via transposed-RHS contraction (no transpose copy).
    gram = lax.dot_general(
        x, xc,
        dimension_numbers=(((1,), (1,)), ((), ())),
        preferred_element_type=jnp.float32,
    )  # (n, tc)

    # Squared pairwise distances for this column tile; clamp commutes with sqrt.
    dist2 = sqcol_ref[...] + sqrow_ref[...] - 2.0 * gram
    dist2 = jnp.maximum(dist2, jnp.float32(1e-12))

    mask = ycol_ref[...] == yrow_ref[...]  # (n, tc) True for same-label pairs (incl. diag)

    pos = jnp.where(mask, dist2, NEG)  # same-label pairs
    neg = jnp.where(mask, POS, dist2)  # different-label pairs (reuse mask, no ~mask)

    rowmax_ref[...] = jnp.maximum(rowmax_ref[...], jnp.max(pos, axis=1, keepdims=True))
    rowmin_ref[...] = jnp.minimum(rowmin_ref[...], jnp.min(neg, axis=1, keepdims=True))

    @pl.when(j == pl.num_programs(0) - 1)
    def _finalize():
        row_max_pos = rowmax_ref[...]  # (n, 1) per-row hardest positive (squared)
        row_min_neg = rowmin_ref[...]  # (n, 1) per-row hardest negative (squared)
        rid = lax.broadcasted_iota(jnp.int32, (n, 1), 0)

        d2_pp = jnp.max(row_max_pos, axis=0, keepdims=True)  # (1,1) hardest positive
        d2_nn = jnp.min(row_min_neg, axis=0, keepdims=True)  # (1,1) hardest negative

        # Anchor rows of the hardest positive / negative pair.
        # Min row-id over ties == row-major-first tie-break (matches torch argmax/argmin).
        max_row = jnp.min(jnp.where(row_max_pos == d2_pp, rid, jnp.int32(n)),
                          axis=0, keepdims=True)
        min_row = jnp.min(jnp.where(row_min_neg == d2_nn, rid, jnp.int32(n)),
                          axis=0, keepdims=True)

        # Closest negative in the hardest-positive row / farthest positive in the
        # hardest-negative row, read straight out of the (n,1) per-row vectors.
        d2_ppn1 = jnp.min(jnp.where(rid == max_row, row_min_neg, POS),
                          axis=0, keepdims=True)
        d2_npp1 = jnp.max(jnp.where(rid == min_row, row_max_pos, NEG),
                          axis=0, keepdims=True)

        # sqrt only on the 4 selected values (O(1) EUP work instead of O(n^2)).
        dist_pp = jnp.sqrt(d2_pp)
        dist_nn = jnp.sqrt(d2_nn)
        dist_ppn1 = jnp.sqrt(d2_ppn1)
        dist_npp1 = jnp.sqrt(d2_npp1)

        # MarginRankingLoss(x1, x2, y=-1) = mean( max(0, (x1 - x2) + margin) )
        m = jnp.float32(margin)
        t1 = jnp.maximum(dist_pp - dist_ppn1 + m, 0.0)
        t2 = jnp.maximum(dist_pp - dist_nn + m, 0.0)
        t3 = jnp.maximum(dist_npp1 - dist_nn + m, 0.0)
        out_ref[...] = (t1 + t2 + t3) * jnp.float32(1.0 / 3.0)


def _pick_col_tile(n):
    """Column tile for the n x n distance matrix; full extent unless n is large/aligned."""
    if n >= 1024:
        for t in (512, 256, 128):
            if n % t == 0:
                return t
    return n


def msm_loss_pallas(X, Y, margin, *, col_tile=None):
    """Pallas implementation of MSMLoss.forward(X, Y). X: (n, d) float, Y: (n,) int."""
    n, d = X.shape
    X = X.astype(jnp.float32)

    # Tiny O(n*d) precompute in the wrapper; avoids an in-kernel (n,1)->(1,n) transpose.
    sq_col = jnp.sum(X * X, axis=1, keepdims=True)  # (n, 1)
    sq_row = jnp.reshape(sq_col, (1, n))            # (1, n)
    ycol = Y.astype(jnp.int32).reshape(n, 1)
    yrow = Y.astype(jnp.int32).reshape(1, n)

    tc = _pick_col_tile(n) if col_tile is None else col_tile
    assert n % tc == 0, "column tile must divide n"
    nct = n // tc

    kernel = functools.partial(_msm_loss_kernel, margin=float(margin))
    out = pl.pallas_call(
        kernel,
        out_shape=jax.ShapeDtypeStruct((1, 1), jnp.float32),
        grid=(nct,),
        in_specs=[
            pl.BlockSpec((n, 1), lambda j: (0, 0)),    # sq_col   (resident)
            pl.BlockSpec((1, tc), lambda j: (0, j)),   # sq_row   column tile
            pl.BlockSpec((n, 1), lambda j: (0, 0)),    # labels as column (resident)
            pl.BlockSpec((1, tc), lambda j: (0, j)),   # labels as row, column tile
            pl.BlockSpec((n, d), lambda j: (0, 0)),    # X (lhs, resident)
            pl.BlockSpec((tc, d), lambda j: (j, 0)),   # X rows forming this column tile
        ],
        out_specs=pl.BlockSpec((1, 1), lambda j: (0, 0)),
        scratch_shapes=[
            pltpu.VMEM((n, 1), jnp.float32),  # per-row running max of positive dist^2
            pltpu.VMEM((n, 1), jnp.float32),  # per-row running min of negative dist^2
        ],
        compiler_params=pltpu.CompilerParams(
            dimension_semantics=("arbitrary",),          # column axis is a reduction
            vmem_limit_bytes=32 * 1024 * 1024,           # safe on v5e/v6e/v7x
        ),
    )(sq_col, sq_row, ycol, yrow, X, X)
    return out[0, 0]


def msm_loss_ref(X, Y, margin):
    """Pure-JAX reference mirroring the PyTorch forward."""
    n = X.shape[0]
    sq = jnp.sum(X * X, axis=1, keepdims=True)
    dist = jnp.sqrt(jnp.maximum(sq + sq.T - 2.0 * X @ X.T, 1e-12))
    mask = Y[:, None] == Y[None, :]

    pos = jnp.where(mask, dist, -jnp.inf)
    neg = jnp.where(mask, jnp.inf, dist)

    dist_pp = jnp.max(pos)
    max_row = jnp.argmax(pos) // n
    dist_nn = jnp.min(neg)
    min_row = jnp.argmin(neg) // n

    dist_ppn1 = jnp.min(jnp.where(mask[max_row], jnp.inf, dist[max_row]))
    dist_npp1 = jnp.max(jnp.where(mask[min_row], dist[min_row], -jnp.inf))

    ap = jnp.stack([dist_pp, dist_pp, dist_npp1])
    an = jnp.stack([dist_ppn1, dist_nn, dist_nn])
    return jnp.mean(jnp.maximum(ap - an + margin, 0.0))


if __name__ == "__main__":
    n, d = 8, 32
    margin = 0.3

    key = jax.random.PRNGKey(0)
    X = jax.random.normal(key, (n, d), dtype=jnp.float32)
    Y = jnp.array([0, 0, 1, 1, 2, 2, 3, 3], dtype=jnp.int32)

    loss = jax.block_until_ready(msm_loss_pallas(X, Y, margin))
    ref = jax.block_until_ready(msm_loss_ref(X, Y, margin))
    assert jnp.allclose(loss, ref, rtol=1e-3, atol=1e-3), (loss, ref)

    print("KERNEL_OK")
</pallas_src>

<mosaic_0001>
module attributes {stable_mosaic.version = 11 : i64} {
  func.func @_msm_loss_kernel(%arg0: i32, %arg1: memref<8x1xf32, #tpu.memory_space<vmem>>, %arg2: memref<1x8xf32, #tpu.memory_space<vmem>>, %arg3: memref<8x1xi32, #tpu.memory_space<vmem>>, %arg4: memref<1x8xi32, #tpu.memory_space<vmem>>, %arg5: memref<8x32xf32, #tpu.memory_space<vmem>>, %arg6: memref<8x32xf32, #tpu.memory_space<vmem>>, %arg7: memref<1x1xf32, #tpu.memory_space<vmem>>, %arg8: memref<8x1xf32, #tpu.memory_space<vmem>>, %arg9: memref<8x1xf32, #tpu.memory_space<vmem>>) attributes {dimension_semantics = [#tpu.dimension_semantics<arbitrary>], iteration_bounds = array<i64: 1>, scalar_prefetch = 0 : i64, scratch_operands = 2 : i64, tpu.core_type = #tpu.core_type<tc>, window_params = [{pipeline_mode = #tpu.pipeline_mode<synchronous>, transform_indices = @transform_0, window_bounds = array<i64: 8, 1>}, {transform_indices = @transform_1, window_bounds = array<i64: 1, 8>}, {pipeline_mode = #tpu.pipeline_mode<synchronous>, transform_indices = @transform_2, window_bounds = array<i64: 8, 1>}, {transform_indices = @transform_3, window_bounds = array<i64: 1, 8>}, {pipeline_mode = #tpu.pipeline_mode<synchronous>, transform_indices = @transform_4, window_bounds = array<i64: 8, 32>}, {transform_indices = @transform_5, window_bounds = array<i64: 8, 32>}, {pipeline_mode = #tpu.pipeline_mode<synchronous>, transform_indices = @transform_6, window_bounds = array<i64: 1, 1>}]} {
    %c0_i32 = arith.constant 0 : i32
    %0 = arith.cmpi eq, %arg0, %c0_i32 : i32
    %1 = arith.extui %0 : i1 to i32
    %cst = arith.constant 0xFF800000 : f32
    %cst_0 = arith.constant 0x7F800000 : f32
    %c0_i32_1 = arith.constant 0 : i32
    %2 = arith.cmpi ne, %1, %c0_i32_1 : i32
    scf.if %2 {
      %38 = vector.broadcast %cst : f32 to vector<8x1xf32>
      %c0_32 = arith.constant 0 : index
      %c0_33 = arith.constant 0 : index
      %39 = vector.load %arg8[%c0_32, %c0_33] : memref<8x1xf32, #tpu.memory_space<vmem>>, vector<8x1xf32>
      tpu.vector_store %arg8[%c0_32, %c0_33], %38 {strides = array<i32>} : memref<8x1xf32, #tpu.memory_space<vmem>>, vector<8x1xf32>,
      %40 = vector.broadcast %cst_0 : f32 to vector<8x1xf32>
      %c0_34 = arith.constant 0 : index
      %c0_35 = arith.constant 0 : index
      %41 = vector.load %arg9[%c0_34, %c0_35] : memref<8x1xf32, #tpu.memory_space<vmem>>, vector<8x1xf32>
      tpu.vector_store %arg9[%c0_34, %c0_35], %40 {strides = array<i32>} : memref<8x1xf32, #tpu.memory_space<vmem>>, vector<8x1xf32>,
    } else {
    }
    %c0 = arith.constant 0 : index
    %c0_2 = arith.constant 0 : index
    %3 = vector.load %arg5[%c0, %c0_2] : memref<8x32xf32, #tpu.memory_space<vmem>>, vector<8x32xf32>
    %c0_3 = arith.constant 0 : index
    %c0_4 = arith.constant 0 : index
    %4 = vector.load %arg6[%c0_3, %c0_4] : memref<8x32xf32, #tpu.memory_space<vmem>>, vector<8x32xf32>
    %cst_5 = arith.constant dense<0.000000e+00> : vector<8x8xf32>
    %5 = tpu.matmul %3, %4, %cst_5 {dimension_numbers = #tpu.dot_dimension_numbers<[1], [1], [0], [0], [0, 0, 1, 0], [], []>} : vector<8x32xf32>, vector<8x32xf32>, vector<8x8xf32> -> vector<8x8xf32>
    %c0_6 = arith.constant 0 : index
    %c0_7 = arith.constant 0 : index
    %6 = vector.load %arg1[%c0_6, %c0_7] : memref<8x1xf32, #tpu.memory_space<vmem>>, vector<8x1xf32>
    %c0_8 = arith.constant 0 : index
    %c0_9 = arith.constant 0 : index
    %7 = vector.load %arg2[%c0_8, %c0_9] : memref<1x8xf32, #tpu.memory_space<vmem>>, vector<1x8xf32>
    %8 = vector.broadcast %6 : vector<8x1xf32> to vector<8x8xf32>
    %9 = vector.broadcast %7 : vector<1x8xf32> to vector<8x8xf32>
    %10 = arith.addf %8, %9 : vector<8x8xf32>
    %cst_10 = arith.constant 2.000000e+00 : f32
    %11 = vector.broadcast %cst_10 : f32 to vector<8x8xf32>
    %12 = arith.mulf %11, %5 : vector<8x8xf32>
    %13 = arith.subf %10, %12 : vector<8x8xf32>
    %cst_11 = arith.constant 9.99999996E-13 : f32
    %14 = vector.broadcast %cst_11 : f32 to vector<8x8xf32>
    %15 = arith.maximumf %13, %14 : vector<8x8xf32>
    %c0_12 = arith.constant 0 : index
    %c0_13 = arith.constant 0 : index
    %16 = vector.load %arg3[%c0_12, %c0_13] : memref<8x1xi32, #tpu.memory_space<vmem>>, vector<8x1xi32>
    %c0_14 = arith.constant 0 : index
    %c0_15 = arith.constant 0 : index
    %17 = vector.load %arg4[%c0_14, %c0_15] : memref<1x8xi32, #tpu.memory_space<vmem>>, vector<1x8xi32>
    %18 = vector.broadcast %16 : vector<8x1xi32> to vector<8x8xi32>
    %19 = vector.broadcast %17 : vector<1x8xi32> to vector<8x8xi32>
    %20 = arith.cmpi eq, %18, %19 : vector<8x8xi32>
    %cst_16 = arith.constant 0xFF800000 : f32
    %21 = vector.broadcast %cst_16 : f32 to vector<8x8xf32>
    %22 = arith.select %20, %15, %21 : vector<8x8xi1>, vector<8x8xf32>
    %cst_17 = arith.constant 0x7F800000 : f32
    %23 = vector.broadcast %cst_17 : f32 to vector<8x8xf32>
    %24 = arith.select %20, %23, %15 : vector<8x8xi1>, vector<8x8xf32>
    %c0_18 = arith.constant 0 : index
    %c0_19 = arith.constant 0 : index
    %25 = vector.load %arg8[%c0_18, %c0_19] : memref<8x1xf32, #tpu.memory_space<vmem>>, vector<8x1xf32>
    %cst_20 = arith.constant dense<0xFF800000> : vector<8xf32>
    %26 = vector.multi_reduction <maximumf>, %22, %cst_20 [1] : vector<8x8xf32> to vector<8xf32>
    %27 = vector.shape_cast %26 : vector<8xf32> to vector<8x1xf32>
    %28 = arith.maximumf %25, %27 : vector<8x1xf32>
    %c0_21 = arith.constant 0 : index
    %c0_22 = arith.constant 0 : index
    %29 = vector.load %arg8[%c0_21, %c0_22] : memref<8x1xf32, #tpu.memory_space<vmem>>, vector<8x1xf32>
    tpu.vector_store %arg8[%c0_21, %c0_22], %28 {strides = array<i32>} : memref<8x1xf32, #tpu.memory_space<vmem>>, vector<8x1xf32>,
    %c0_23 = arith.constant 0 : index
    %c0_24 = arith.constant 0 : index
    %30 = vector.load %arg9[%c0_23, %c0_24] : memref<8x1xf32, #tpu.memory_space<vmem>>, vector<8x1xf32>
    %cst_25 = arith.constant dense<0x7F800000> : vector<8xf32>
    %31 = vector.multi_reduction <minimumf>, %24, %cst_25 [1] : vector<8x8xf32> to vector<8xf32>
    %32 = vector.shape_cast %31 : vector<8xf32> to vector<8x1xf32>
    %33 = arith.minimumf %30, %32 : vector<8x1xf32>
    %c0_26 = arith.constant 0 : index
    %c0_27 = arith.constant 0 : index
    %34 = vector.load %arg9[%c0_26, %c0_27] : memref<8x1xf32, #tpu.memory_space<vmem>>, vector<8x1xf32>
    tpu.vector_store %arg9[%c0_26, %c0_27], %33 {strides = array<i32>} : memref<8x1xf32, #tpu.memory_space<vmem>>, vector<8x1xf32>,
    %c0_i32_28 = arith.constant 0 : i32
    %35 = arith.cmpi eq, %arg0, %c0_i32_28 : i32
    %36 = arith.extui %35 : i1 to i32
    %cst_29 = arith.constant 0x7F800000 : f32
    %cst_30 = arith.constant 0xFF800000 : f32
    %c0_i32_31 = arith.constant 0 : i32
    %37 = arith.cmpi ne, %36, %c0_i32_31 : i32
    scf.if %37 {
      %c0_32 = arith.constant 0 : index
      %c0_33 = arith.constant 0 : index
      %38 = vector.load %arg8[%c0_32, %c0_33] : memref<8x1xf32, #tpu.memory_space<vmem>>, vector<8x1xf32>
      %c0_34 = arith.constant 0 : index
      %c0_35 = arith.constant 0 : index
      %39 = vector.load %arg9[%c0_34, %c0_35] : memref<8x1xf32, #tpu.memory_space<vmem>>, vector<8x1xf32>
      %40 = tpu.iota {dimensions = array<i32: 0>} : vector<8x1xi32>
      %cst_36 = arith.constant dense<0xFF800000> : vector<1xf32>
      %41 = vector.multi_reduction <maximumf>, %38, %cst_36 [0] : vector<8x1xf32> to vector<1xf32>
      %42 = vector.shape_cast %41 : vector<1xf32> to vector<1x1xf32>
      %cst_37 = arith.constant dense<0x7F800000> : vector<1xf32>
      %43 = vector.multi_reduction <minimumf>, %39, %cst_37 [0] : vector<8x1xf32> to vector<1xf32>
      %44 = vector.shape_cast %43 : vector<1xf32> to vector<1x1xf32>
      %45 = vector.broadcast %42 : vector<1x1xf32> to vector<8x1xf32>
      %46 = arith.cmpf oeq, %38, %45 : vector<8x1xf32>
      %c8_i32 = arith.constant 8 : i32
      %47 = vector.broadcast %c8_i32 : i32 to vector<8x1xi32>
      %48 = arith.select %46, %40, %47 : vector<8x1xi1>, vector<8x1xi32>
      %cst_38 = arith.constant dense<2147483647> : vector<1xi32>
      %49 = vector.multi_reduction <minsi>, %48, %cst_38 [0] : vector<8x1xi32> to vector<1xi32>
      %50 = vector.shape_cast %49 : vector<1xi32> to vector<1x1xi32>
      %51 = vector.broadcast %44 : vector<1x1xf32> to vector<8x1xf32>
      %52 = arith.cmpf oeq, %39, %51 : vector<8x1xf32>
      %c8_i32_39 = arith.constant 8 : i32
      %53 = vector.broadcast %c8_i32_39 : i32 to vector<8x1xi32>
      %54 = arith.select %52, %40, %53 : vector<8x1xi1>, vector<8x1xi32>
      %cst_40 = arith.constant dense<2147483647> : vector<1xi32>
      %55 = vector.multi_reduction <minsi>, %54, %cst_40 [0] : vector<8x1xi32> to vector<1xi32>
      %56 = vector.shape_cast %55 : vector<1xi32> to vector<1x1xi32>
      %57 = vector.broadcast %50 : vector<1x1xi32> to vector<8x1xi32>
      %58 = arith.cmpi eq, %40, %57 : vector<8x1xi32>
      %59 = vector.broadcast %cst_29 : f32 to vector<8x1xf32>
      %60 = arith.select %58, %39, %59 : vector<8x1xi1>, vector<8x1xf32>
      %cst_41 = arith.constant dense<0x7F800000> : vector<1xf32>
      %61 = vector.multi_reduction <minimumf>, %60, %cst_41 [0] : vector<8x1xf32> to vector<1xf32>
      %62 = vector.shape_cast %61 : vector<1xf32> to vector<1x1xf32>
      %63 = vector.broadcast %56 : vector<1x1xi32> to vector<8x1xi32>
      %64 = arith.cmpi eq, %40, %63 : vector<8x1xi32>
      %65 = vector.broadcast %cst_30 : f32 to vector<8x1xf32>
      %66 = arith.select %64, %38, %65 : vector<8x1xi1>, vector<8x1xf32>
      %cst_42 = arith.constant dense<0xFF800000> : vector<1xf32>
      %67 = vector.multi_reduction <maximumf>, %66, %cst_42 [0] : vector<8x1xf32> to vector<1xf32>
      %68 = vector.shape_cast %67 : vector<1xf32> to vector<1x1xf32>
      %69 = math.sqrt %42 : vector<1x1xf32>
      %70 = math.sqrt %44 : vector<1x1xf32>
      %71 = math.sqrt %62 : vector<1x1xf32>
      %72 = math.sqrt %68 : vector<1x1xf32>
      %73 = arith.subf %69, %71 : vector<1x1xf32>
      %cst_43 = arith.constant 3.000000e-01 : f32
      %74 = vector.broadcast %cst_43 : f32 to vector<1x1xf32>
      %75 = arith.addf %73, %74 : vector<1x1xf32>
      %cst_44 = arith.constant 0.000000e+00 : f32
      %76 = vector.broadcast %cst_44 : f32 to vector<1x1xf32>
      %77 = arith.maximumf %75, %76 : vector<1x1xf32>
      %78 = arith.subf %69, %70 : vector<1x1xf32>
      %cst_45 = arith.constant 3.000000e-01 : f32
      %79 = vector.broadcast %cst_45 : f32 to vector<1x1xf32>
      %80 = arith.addf %78, %79 : vector<1x1xf32>
      %cst_46 = arith.constant 0.000000e+00 : f32
      %81 = vector.broadcast %cst_46 : f32 to vector<1x1xf32>
      %82 = arith.maximumf %80, %81 : vector<1x1xf32>
      %83 = arith.subf %72, %70 : vector<1x1xf32>
      %cst_47 = arith.constant 3.000000e-01 : f32
      %84 = vector.broadcast %cst_47 : f32 to vector<1x1xf32>
      %85 = arith.addf %83, %84 : vector<1x1xf32>
      %cst_48 = arith.constant 0.000000e+00 : f32
      %86 = vector.broadcast %cst_48 : f32 to vector<1x1xf32>
      %87 = arith.maximumf %85, %86 : vector<1x1xf32>
      %88 = arith.addf %77, %82 : vector<1x1xf32>
      %89 = arith.addf %88, %87 : vector<1x1xf32>
      %cst_49 = arith.constant 0.333333343 : f32
      %90 = vector.broadcast %cst_49 : f32 to vector<1x1xf32>
      %91 = arith.mulf %89, %90 : vector<1x1xf32>
      %c0_50 = arith.constant 0 : index
      %c0_51 = arith.constant 0 : index
      %92 = vector.load %arg7[%c0_50, %c0_51] : memref<1x1xf32, #tpu.memory_space<vmem>>, vector<1x1xf32>
      tpu.vector_store %arg7[%c0_50, %c0_51], %91 {strides = array<i32>} : memref<1x1xf32, #tpu.memory_space<vmem>>, vector<1x1xf32>,
    } else {
    }
    return
  }
  func.func @transform_0(%arg0: i32) -> (i32, i32) {
    %c0_i32 = arith.constant 0 : i32
    %c0_i32_0 = arith.constant 0 : i32
    %c0_i32_1 = arith.constant 0 : i32
    return %c0_i32, %c0_i32_0 : i32, i32
  }
  func.func @transform_1(%arg0: i32) -> (i32, i32) {
    %c0_i32 = arith.constant 0 : i32
    %c0_i32_0 = arith.constant 0 : i32
    return %c0_i32, %arg0 : i32, i32
  }
  func.func @transform_2(%arg0: i32) -> (i32, i32) {
    %c0_i32 = arith.constant 0 : i32
    %c0_i32_0 = arith.constant 0 : i32
    %c0_i32_1 = arith.constant 0 : i32
    return %c0_i32, %c0_i32_0 : i32, i32
  }
  func.func @transform_3(%arg0: i32) -> (i32, i32) {
    %c0_i32 = arith.constant 0 : i32
    %c0_i32_0 = arith.constant 0 : i32
    return %c0_i32, %arg0 : i32, i32
  }
  func.func @transform_4(%arg0: i32) -> (i32, i32) {
    %c0_i32 = arith.constant 0 : i32
    %c0_i32_0 = arith.constant 0 : i32
    %c0_i32_1 = arith.constant 0 : i32
    return %c0_i32, %c0_i32_0 : i32, i32
  }
  func.func @transform_5(%arg0: i32) -> (i32, i32) {
    %c0_i32 = arith.constant 0 : i32
    %c0_i32_0 = arith.constant 0 : i32
    return %arg0, %c0_i32 : i32, i32
  }
  func.func @transform_6(%arg0: i32) -> (i32, i32) {
    %c0_i32 = arith.constant 0 : i32
    %c0_i32_0 = arith.constant 0 : i32
    %c0_i32_1 = arith.constant 0 : i32
    return %c0_i32, %c0_i32_0 : i32, i32
  }
}

</mosaic_0001>

<llo_original>
// kernel: tpu_custom_call.1
$region0: #{tpu_custom_call.1}
  #allocation0 [shape = 'u32[]', space=smem, size = 0x4, offset = 0x4, fixed_abs, tag = 'smem constant byte address 0x4 - core index']
  #allocation1 [shape = 'u32[144,128]{1,0:T(1,128)}', space=vmem, size = 0x12000, scoped, tag = 'internal scratch']
  #allocation2 [shape = 'f32[8,1]{1,0:T(8,128)}', space=vmem, size = 0x1000, scoped, tag = 'scratch operand']
  #allocation3 [shape = 'f32[8,1]{1,0:T(8,128)}', space=vmem, size = 0x1000, scoped, tag = 'scratch operand']
  %s0 = inlined_call_operand.vmem [shape: f32[8,1], index: 0, kind: input, shape index: {}]
  %s1 = inlined_call_operand.vmem [shape: f32[1,8], index: 1, kind: input, shape index: {}]
  %s2 = inlined_call_operand.vmem [shape: s32[8,1], index: 2, kind: input, shape index: {}]
  %s3 = inlined_call_operand.vmem [shape: s32[1,8], index: 3, kind: input, shape index: {}]
  %s4 = inlined_call_operand.vmem [shape: f32[8,32], index: 4, kind: input, shape index: {}]
  %s5 = inlined_call_operand.vmem [shape: f32[8,32], index: 5, kind: input, shape index: {}]
  %s6 = inlined_call_operand.hbm [shape: f32[1,1], index: 6, kind: output, shape index: {}]
  %s7 = sld [smem:[#allocation0]]
  $region42: #{tpu_custom_call.1} parent=0
    _
  %s9 = ssub.s32 1, %s7
  %s10 = scalar_select 0, %s9, %s7
  $region1: #{tpu_custom_call.1} parent=0
    #allocation4 [shape = 'u8[512]{0}', space=vmem, size = 0x400, scoped, tag = 'output window, operand 0, single buffered']
    #allocation5 [shape = 's32[1]{0}', space=sflag, size = 0x4, scoped, tag = 'scoped memory for tpu_custom_call.1']
    %11 = vsyncpa [#allocation5], 0
    // Predicated region
    $region2: #{tpu_custom_call.1} parent=1 // pred_check
      _
    $region3: #{tpu_custom_call.1} parent=1 // pred_check_branch
      %13 = sbr.rel (0) target = $region5
    $region4: #{tpu_custom_call.1} parent=1 // pred_region
      _
    $region5: #{tpu_custom_call.1} parent=1 // pred_fallthru
      _
    // Predicated region
    $region6: #{tpu_custom_call.1} parent=1 // pred_check
      _
    $region7: #{tpu_custom_call.1} parent=1 // pred_check_branch
      %15 = sbr.rel (0) target = $region9
    $region8: #{tpu_custom_call.1} parent=1 // pred_region
      _
    $region9: #{tpu_custom_call.1} parent=1 // pred_fallthru
      _
    // Predicated region
    $region10: #{tpu_custom_call.1} parent=1 // pred_check
      _
    $region11: #{tpu_custom_call.1} parent=1 // pred_check_branch
      %17 = sbr.rel (0) target = $region13
    $region12: #{tpu_custom_call.1} parent=1 // pred_region
      _
    $region13: #{tpu_custom_call.1} parent=1 // pred_fallthru
      _
    // Predicated region
    $region14: #{tpu_custom_call.1} parent=1 // pred_check
      _
    $region15: #{tpu_custom_call.1} parent=1 // pred_check_branch
      %19 = sbr.rel (0) target = $region17
    $region16: #{tpu_custom_call.1} parent=1 // pred_region
      _
    $region17: #{tpu_custom_call.1} parent=1 // pred_fallthru
      _
    // Predicated region
    $region18: #{tpu_custom_call.1} parent=1 // pred_check
      _
    $region19: #{tpu_custom_call.1} parent=1 // pred_check_branch
      %21 = sbr.rel (0) target = $region21
    $region20: #{tpu_custom_call.1} parent=1 // pred_region
      _
    $region21: #{tpu_custom_call.1} parent=1 // pred_fallthru
      _
    // Predicated region
    $region22: #{tpu_custom_call.1} parent=1 // pred_check
      _
    $region23: #{tpu_custom_call.1} parent=1 // pred_check_branch
      %23 = sbr.rel (0) target = $region25
    $region24: #{tpu_custom_call.1} parent=1 // pred_region
      _
    $region25: #{tpu_custom_call.1} parent=1 // pred_fallthru
      _
    %p24 = scmp.eq.s32.totalorder 0, 0
    // Predicated region
    $region26: #{tpu_custom_call.1} parent=1 // pred_check
      %p25 = pneg %p24
    $region27: #{tpu_custom_call.1} parent=1 // pred_check_branch
      %27 = sbr.rel (%p25) target = $region29
    $region28: #{tpu_custom_call.1} parent=1 // pred_region
      %vm28 = vcmask 7168
      %29 = vst.msk [vmem:[#allocation2] sm:$0xff] %vm28, -inf
      %30 = vst.msk [vmem:[#allocation3] sm:$0xff] %vm28, inf
    $region29: #{tpu_custom_call.1} parent=1 // pred_fallthru
      _
    %v31 = vld [vmem:[%s4] sm:$0xff]
    %v32 = vld [vmem:[%s5] sm:$0xff]
    %vm33 = vcmask 261120
    %v35 = vsel %vm33, %v31, 0
    %v38 = vsel %vm33, %v32, 0
    %40 = vmatprep.subr.mxu0 0.0
    %41 = vmatpush1.xpose.msra.mxu0 0.0
    %42 = vmatprep.subr.mxu0 0.0
    %43 = vmatpush1.xpose.msra.mxu0 0.0
    %44 = vmatprep.subr.mxu0 0.0
    %45 = vmatpush1.xpose.msra.mxu0 0.0
    %46 = vmatprep.subr.mxu0 0.0
    %47 = vmatpush1.xpose.msra.mxu0 0.0
    %48 = vmatprep.subr.mxu0 0.0
    %49 = vmatpush1.xpose.msra.mxu0 0.0
    %50 = vmatprep.subr.mxu0 0.0
    %51 = vmatpush1.xpose.msra.mxu0 0.0
    %52 = vmatprep.subr.mxu0 0.0
    %53 = vmatpush1.xpose.msra.mxu0 0.0
    %54 = vmatprep.subr.mxu0 0.0
    %55 = vmatpush1.xpose.msra.mxu0 0.0
    %56 = vmatprep.subr.mxu0 0.0
    %57 = vmatpush1.xpose.msra.mxu0 0.0
    %58 = vmatprep.subr.mxu0 0.0
    %59 = vmatpush1.xpose.msra.mxu0 0.0
    %60 = vmatprep.subr.mxu0 0.0
    %61 = vmatpush1.xpose.msra.mxu0 0.0
    %62 = vmatprep.subr.mxu0 0.0
    %63 = vmatpush1.xpose.msra.mxu0 0.0
    %64 = vmatprep.subr.mxu0 0.0
    %65 = vmatpush1.xpose.msra.mxu0 0.0
    %66 = vmatprep.subr.mxu0 0.0
    %67 = vmatpush1.xpose.msra.mxu0 0.0
    %68 = vmatprep.subr.mxu0 0.0
    %69 = vmatpush1.xpose.msra.mxu0 0.0
    %70 = vmatprep.subr.mxu0 0.0
    %71 = vmatpush1.xpose.msra.mxu0 %v38
    %72 = vmatprep.subr.mxu0 0.0
    %73 = vmatpush2.xpose.msra.mxu0 0.0
    %74 = vmatprep.subr.mxu0 0.0
    %75 = vmatpush2.xpose.msra.mxu0 0.0
    %76 = vmatprep.subr.mxu0 0.0
    %77 = vmatpush2.xpose.msra.mxu0 0.0
    %78 = vmatprep.subr.mxu0 0.0
    %79 = vmatpush2.xpose.msra.mxu0 0.0
    %80 = vmatprep.subr.mxu0 0.0
    %81 = vmatpush2.xpose.msra.mxu0 0.0
    %82 = vmatprep.subr.mxu0 0.0
    %83 = vmatpush2.xpose.msra.mxu0 0.0
    %84 = vmatprep.subr.mxu0 0.0
    %85 = vmatpush2.xpose.msra.mxu0 0.0
    %86 = vmatprep.subr.mxu0 0.0
    %87 = vmatpush2.xpose.msra.mxu0 0.0
    %88 = vmatprep.subr.mxu0 0.0
    %89 = vmatpush2.xpose.msra.mxu0 0.0
    %90 = vmatprep.subr.mxu0 0.0
    %91 = vmatpush2.xpose.msra.mxu0 0.0
    %92 = vmatprep.subr.mxu0 0.0
    %93 = vmatpush2.xpose.msra.mxu0 0.0
    %94 = vmatprep.subr.mxu0 0.0
    %95 = vmatpush2.xpose.msra.mxu0 0.0
    %96 = vmatprep.subr.mxu0 0.0
    %97 = vmatpush2.xpose.msra.mxu0 0.0
    %98 = vmatprep.subr.mxu0 0.0
    %99 = vmatpush2.xpose.msra.mxu0 0.0
    %100 = vmatprep.subr.mxu0 0.0
    %101 = vmatpush2.xpose.msra.mxu0 0.0
    %102 = vmatprep.subr.mxu0 0.0
    %103 = vmatpush2.xpose.msra.mxu0 0.0
    %104 = vmatprep.mubr.f32.mxu0 0.0
    %105 = vmatmul.mubr.f32.gmra.mxu0 %v35
    %v106 = vpop.f32.mrf.mxu0
    %v107 = vadd.f32 0.0, %v106
    %v108 = vpop.f32.mrf.mxu0
    %109 = vdwg.mxu0
    %v110 = vld [vmem:[%s0] sm:$0xff]
    %v111 = vld [vmem:[%s1] sm:$0x1]
    %113 = vset.pattern.permute.xlu0 0
    %114 = vperm.xlu0 %113, %v110
    %v115 = vpop.permute.xlu0 %114
    %v118 = vlaneseq
    %v119 = vshrl.u32 %v118, 7
    %v120 = vsub.s32 0, %v119
    %v121 = vrot.slane %v111, %v120
    %v123 = vadd.f32 %v115, %v121
    %v124 = vmul.f32 %v107, 2.0
    %v125 = vsub.f32 %v123, %v124
    %v126 = vmax.f32 %v125, 1e-12
    %v127 = vld [vmem:[%s2] sm:$0xff]
    %v128 = vld [vmem:[%s3] sm:$0x1]
    %129 = vset.pattern.permute.xlu0 0
    %130 = vperm.xlu0 %129, %v127
    %v131 = vpop.permute.xlu0 %130
    %v132 = vlaneseq
    %v133 = vshrl.u32 %v132, 7
    %v134 = vsub.s32 0, %v133
    %v135 = vrot.slane %v128, %v134
    %vm136 = vcmp.eq.s32.totalorder %v131, %v135
    %v137 = vsel %vm136, %v126, -inf
    %v138 = vsel %vm136, inf, %v126
    %v139 = vld [vmem:[#allocation2] sm:$0xff]
    %vm140 = vcmask 64512
    %v141 = vsel %vm140, %v137, -inf
    %142 = vmax.xlane.f32.xlu0 %v141
    %v143 = vpop.xlane.xlu0 %142
    %v144 = vmax.f32 %v139, %v143
    %vm145 = vcmask 7168
    %146 = vst.msk [vmem:[#allocation2] sm:$0xff] %vm145, %v144
    %v147 = vld [vmem:[#allocation3] sm:$0xff]
    %v148 = vsel %vm140, %v138, inf
    %149 = vmin.xlane.f32.xlu0 %v148
    %v150 = vpop.xlane.xlu0 %149
    %v151 = vmin.f32 %v147, %v150
    %152 = vst.msk [vmem:[#allocation3] sm:$0xff] %vm145, %v151
    // Predicated region
    $region30: #{tpu_custom_call.1} parent=1 // pred_check
      %p153 = pneg %p24
    $region31: #{tpu_custom_call.1} parent=1 // pred_check_branch
      %155 = sbr.rel (%p153) target = $region33
    $region32: #{tpu_custom_call.1} parent=1 // pred_region
      %v156 = vld [vmem:[#allocation2] sm:$0xff]
      %v157 = vld [vmem:[#allocation3] sm:$0xff]
      %v158 = vlaneseq
      %v159 = vshrl.u32 %v158, 7
      %v160 = vsel %vm145, %v156, -inf
      %v161 = vrot.slane %v160, 4
      %v162 = vmax.f32 %v160, %v161
      %v163 = vrot.slane %v162, 2
      %v164 = vmax.f32 %v162, %v163
      %v165 = vrot.slane %v164, 1
      %v166 = vmax.f32 %v164, %v165
      %v167 = vsel %vm145, %v157, inf
      %v168 = vrot.slane %v167, 4
      %v169 = vmin.f32 %v167, %v168
      %v170 = vrot.slane %v169, 2
      %v171 = vmin.f32 %v169, %v170
      %v172 = vrot.slane %v171, 1
      %v173 = vmin.f32 %v171, %v172
      %vm174 = vcmp.eq.f32.partialorder %v156, %v166
      %v175 = vsel %vm174, %v159, 8
      %v176 = vsel %vm145, %v175, 2147483647
      %v177 = vrot.slane %v176, 4
      %vm178 = vcmp.lt.s32.totalorder %v176, %v177
      %v179 = vsel %vm178, %v176, %v177
      %v180 = vrot.slane %v179, 2
      %vm181 = vcmp.lt.s32.totalorder %v179, %v180
      %v182 = vsel %vm181, %v179, %v180
      %v183 = vrot.slane %v182, 1
      %vm184 = vcmp.lt.s32.totalorder %v182, %v183
      %v185 = vsel %vm184, %v182, %v183
      %vm186 = vcmp.eq.f32.partialorder %v157, %v173
      %v187 = vsel %vm186, %v159, 8
      %v188 = vsel %vm145, %v187, 2147483647
      %v189 = vrot.slane %v188, 4
      %vm190 = vcmp.lt.s32.totalorder %v188, %v189
      %v191 = vsel %vm190, %v188, %v189
      %v192 = vrot.slane %v191, 2
      %vm193 = vcmp.lt.s32.totalorder %v191, %v192
      %v194 = vsel %vm193, %v191, %v192
      %v195 = vrot.slane %v194, 1
      %vm196 = vcmp.lt.s32.totalorder %v194, %v195
      %v197 = vsel %vm196, %v194, %v195
      %vm198 = vcmp.eq.s32.totalorder %v159, %v185
      %v199 = vsel %vm198, %v157, inf
      %v200 = vsel %vm145, %v199, inf
      %v201 = vrot.slane %v200, 4
      %v202 = vmin.f32 %v200, %v201
      %v203 = vrot.slane %v202, 2
      %v204 = vmin.f32 %v202, %v203
      %v205 = vrot.slane %v204, 1
      %v206 = vmin.f32 %v204, %v205
      %vm207 = vcmp.eq.s32.totalorder %v159, %v197
      %v208 = vsel %vm207, %v156, -inf
      %v209 = vsel %vm145, %v208, -inf
      %v210 = vrot.slane %v209, 4
      %v211 = vmax.f32 %v209, %v210
      %v212 = vrot.slane %v211, 2
      %v213 = vmax.f32 %v211, %v212
      %v214 = vrot.slane %v213, 1
      %v215 = vmax.f32 %v213, %v214
      %v216 = vrsqrt.pop %v166
      %v217 = vmul.f32 %v166, %v216
      %vm218 = vcmp.eq.f32.partialorder %v166, inf
      %v219 = vsel %vm218, %v166, %v217
      %vm220 = vcmp.eq.f32.partialorder %v166, 0.0
      %v221 = vand.u32 %v166, 2147483648
      %v222 = vsel %vm220, %v221, %v219
      %v223 = vrsqrt.pop %v173
      %v224 = vmul.f32 %v173, %v223
      %vm225 = vcmp.eq.f32.partialorder %v173, inf
      %v226 = vsel %vm225, %v173, %v224
      %vm227 = vcmp.eq.f32.partialorder %v173, 0.0
      %v228 = vand.u32 %v173, 2147483648
      %v229 = vsel %vm227, %v228, %v226
      %v230 = vrsqrt.pop %v206
      %v231 = vmul.f32 %v206, %v230
      %vm232 = vcmp.eq.f32.partialorder %v206, inf
      %v233 = vsel %vm232, %v206, %v231
      %vm234 = vcmp.eq.f32.partialorder %v206, 0.0
      %v235 = vand.u32 %v206, 2147483648
      %v236 = vsel %vm234, %v235, %v233
      %v237 = vrsqrt.pop %v215
      %v238 = vmul.f32 %v215, %v237
      %vm239 = vcmp.eq.f32.partialorder %v215, inf
      %v240 = vsel %vm239, %v215, %v238
      %vm241 = vcmp.eq.f32.partialorder %v215, 0.0
      %v242 = vand.u32 %v215, 2147483648
      %v243 = vsel %vm241, %v242, %v240
      %v244 = vsub.f32 %v222, %v236
      %v245 = vadd.f32 %v244, 0.3
      %v246 = vmax.f32 %v245, 0.0
      %v247 = vsub.f32 %v222, %v229
      %v248 = vadd.f32 %v247, 0.3
      %v249 = vmax.f32 %v248, 0.0
      %v250 = vsub.f32 %v243, %v229
      %v251 = vadd.f32 %v250, 0.3
      %v252 = vmax.f32 %v251, 0.0
      %v253 = vadd.f32 %v246, %v249
      %v254 = vadd.f32 %v253, %v252
      %v255 = vmul.f32 %v254, 0.33333334
      %vm256 = vcmask 0
      %257 = vst.msk [vmem:[#allocation4] sm:$0x1] %vm256, %v255
    $region33: #{tpu_custom_call.1} parent=1 // pred_fallthru
      _
    // Predicated region
    $region34: #{tpu_custom_call.1} parent=1 // pred_check
      _
    $region35: #{tpu_custom_call.1} parent=1 // pred_check_branch
      %259 = sbr.rel (0) target = $region37
    $region36: #{tpu_custom_call.1} parent=1 // pred_region
      %s261 = ssub.s32 16, 16
      %262 = vsyncadd [#allocation5], %s261
      %s264 = sshll.u32 [#allocation4], 4
      %s265 = int_to_ptr.vmem [resolvable:$true] %s264
      %267 = dma.vmem_to_hbm [thread:$0]  %s265, 16, %s6, [#allocation5]
    $region37: #{tpu_custom_call.1} parent=1 // pred_fallthru
      _
    // Predicated region
    $region38: #{tpu_custom_call.1} parent=1 // pred_check
      _
    $region39: #{tpu_custom_call.1} parent=1 // pred_check_branch
      %269 = sbr.rel (0) target = $region41
    $region40: #{tpu_custom_call.1} parent=1 // pred_region
      %270 = dma.done [#allocation5], 16
    $region41: #{tpu_custom_call.1} parent=1 // pred_fallthru
      _
    %271 = vsyncpa [#allocation5], 1

</llo_original>
